<compile_context>
chip_gen: v6e
topology: v6e:2x2x1
jax: 0.10.0
libtpu: 0.0.40
codegen_flags: <defaults>
</compile_context>

<pallas_src>
import jax
import jax.numpy as jnp
from jax.experimental import pallas as pl
from jax.experimental.pallas import tpu as pltpu

BN_EPS = 1e-5

# ---- model hyper-params (synthetic, small) ----
FACTOR = 0.5
N_INPUT = 64            # stand-in for torch_dataset_cancer.n_input_layer
N_LATENT = 2
N_REDUCTION = 2
BATCH = 8

H1 = int(N_INPUT * FACTOR ** 1)   # 32
H2 = int(N_INPUT * FACTOR ** 2)   # 16

# ---- packed-parameter layout ----
PACK_W = 64                 # lane width of both parameter packs (max fan_out = 64)

# weight pack: row-block offsets (all starts multiples of 8)
ROW_E1 = 0                  # [64, 32]
ROW_E2 = 64                 # [32, 16]
ROW_ML = 96                 # [16,  4]  fused (mu | logvar) head
ROW_DL = 112                # [ 2, 16]  (block padded to 8 rows)
ROW_D2 = 120                # [16, 32]
ROW_D1 = 136                # [32, 64]
W_ROWS = 168

# vector pack: one row per bias / gamma / beta
VEC_E1 = 0    # rows 0,1,2  : b, gamma, beta   (width 32)
VEC_E2 = 3    # rows 3,4,5                     (width 16)
VEC_ML = 6    # rows 6,7,8                     (width 4, fused mu|lv)
VEC_DL = 9    # rows 9,10,11                   (width 16)
VEC_D2 = 12   # rows 12,13,14                  (width 32)
VEC_D1 = 15   # row 15      : bias only        (width 64)
VEC_ROWS = 16


# ----------------------------------------------------------------------------- kernel
def vae_kernel(x_ref, eps_ref, w_ref, v_ref, recon_ref, z_ref, mu_ref, lv_ref):
    x = x_ref[...]
    eps = eps_ref[...]
    inv_n = 1.0 / BATCH

    def relu_bn(y, vrow, fo):
        """ReLU followed by training-mode BatchNorm1d.

        One cross-sublane reduce over [y | y*y] (single XLU round trip), gamma folded
        into scale so per-element work is one FMA."""
        y = jnp.maximum(y, 0.0)
        sums = jnp.sum(jnp.concatenate([y, y * y], axis=1), axis=0, keepdims=True)
        mean = sums[:, 0:fo] * inv_n
        var = jnp.maximum(sums[:, fo:2 * fo] * inv_n - mean * mean, 0.0)
        g = v_ref[vrow + 1:vrow + 2, 0:fo]
        be = v_ref[vrow + 2:vrow + 3, 0:fo]
        scale = jax.lax.rsqrt(var + BN_EPS) * g
        shift = be - mean * scale
        return y * scale + shift

    def layer(h, wrow, fi, fo, vrow):
        w = w_ref[wrow:wrow + fi, 0:fo]
        b = v_ref[vrow:vrow + 1, 0:fo]
        y = jnp.dot(h, w, preferred_element_type=jnp.float32) + b
        return relu_bn(y, vrow, fo)

    # ---------------- encoder ----------------
    h = layer(x, ROW_E1, N_INPUT, H1, VEC_E1)
    h = layer(h, ROW_E2, H1, H2, VEC_E2)

    # fused mu / logvar head: one matmul + one BN (per-feature => exact), then slice
    ml = layer(h, ROW_ML, H2, 2 * N_LATENT, VEC_ML)
    mu = ml[:, 0:N_LATENT]
    lv = ml[:, N_LATENT:2 * N_LATENT]

    # ------------- reparameterize -------------
    z = eps * jnp.exp(0.5 * lv) + mu

    # ---------------- decoder ----------------
    # first decoder layer: fan_in = 2 -> VPU outer product, keep off the MXU
    w_dl0 = w_ref[ROW_DL:ROW_DL + 1, 0:H2]
    w_dl1 = w_ref[ROW_DL + 1:ROW_DL + 2, 0:H2]
    b_dl = v_ref[VEC_DL:VEC_DL + 1, 0:H2]
    y_dl = z[:, 0:1] * w_dl0 + z[:, 1:2] * w_dl1 + b_dl
    d = relu_bn(y_dl, VEC_DL, H2)

    d = layer(d, ROW_D2, H2, H1, VEC_D2)

    w1 = w_ref[ROW_D1:ROW_D1 + H1, 0:N_INPUT]
    b1 = v_ref[VEC_D1:VEC_D1 + 1, 0:N_INPUT]
    recon = jax.nn.sigmoid(jnp.dot(d, w1, preferred_element_type=jnp.float32) + b1)

    # ------------- outputs: one full write per ref -------------
    recon_ref[...] = recon
    z_ref[...] = z
    mu_ref[...] = mu
    lv_ref[...] = lv


# ----------------------------------------------------------------------------- params
def init_params(key):
    """PyTorch-default-like init: Linear W,b ~ U(-1/sqrt(fan_in), 1/sqrt(fan_in));
    BN gamma=1, beta=0.  Returns (raw param dict, packed weight slab, packed vec slab)."""

    def linear(k, fi, fo):
        k1, k2 = jax.random.split(k)
        bound = 1.0 / (float(fi) ** 0.5)
        w = jax.random.uniform(k1, (fi, fo), jnp.float32, -bound, bound)
        b = jax.random.uniform(k2, (fo,), jnp.float32, -bound, bound)
        return w, b

    def bn(fo):
        return jnp.ones((fo,), jnp.float32), jnp.zeros((fo,), jnp.float32)

    keys = jax.random.split(key, 7)
    raw = {}
    # encoder: fc_e1 (64->32), fc_e2 (32->16)
    for name, k, (fi, fo) in zip(("e1", "e2"), keys[:2], [(N_INPUT, H1), (H1, H2)]):
        w, b = linear(k, fi, fo)
        g, be = bn(fo)
        raw[name] = (w, b, g, be)
    # latent heads: fc_e_l_mu, fc_e_l_var (16->2)
    for name, k in zip(("mu", "var"), keys[2:4]):
        w, b = linear(k, H2, N_LATENT)
        g, be = bn(N_LATENT)
        raw[name] = (w, b, g, be)
    # decoder: fc_d_l (2->16), fc_d2 (16->32)
    for name, k, (fi, fo) in zip(("dl", "d2"), keys[4:6], [(N_LATENT, H2), (H2, H1)]):
        w, b = linear(k, fi, fo)
        g, be = bn(fo)
        raw[name] = (w, b, g, be)
    # fc_d1 (32->64), no BN / no ReLU (sigmoid output)
    w, b = linear(keys[6], H1, N_INPUT)
    raw["d1"] = (w, b)

    # ---- pack weights into one [W_ROWS, PACK_W] slab ----
    w_ml = jnp.concatenate([raw["mu"][0], raw["var"][0]], axis=1)      # [H2, 4]
    w_pack = jnp.zeros((W_ROWS, PACK_W), jnp.float32)
    for row, w in ((ROW_E1, raw["e1"][0]), (ROW_E2, raw["e2"][0]), (ROW_ML, w_ml),
                   (ROW_DL, raw["dl"][0]), (ROW_D2, raw["d2"][0]), (ROW_D1, raw["d1"][0])):
        w_pack = w_pack.at[row:row + w.shape[0], 0:w.shape[1]].set(w)

    # ---- pack biases / gammas / betas into one [VEC_ROWS, PACK_W] slab ----
    vec_pack = jnp.zeros((VEC_ROWS, PACK_W), jnp.float32)
    ml_vecs = tuple(jnp.concatenate([raw["mu"][i], raw["var"][i]]) for i in (1, 2, 3))
    for base, vecs in ((VEC_E1, raw["e1"][1:]), (VEC_E2, raw["e2"][1:]), (VEC_ML, ml_vecs),
                       (VEC_DL, raw["dl"][1:]), (VEC_D2, raw["d2"][1:])):
        for off, v in enumerate(vecs):
            vec_pack = vec_pack.at[base + off, 0:v.shape[0]].set(v)
    vec_pack = vec_pack.at[VEC_D1, 0:N_INPUT].set(raw["d1"][1])

    return raw, w_pack, vec_pack


# ----------------------------------------------------------------------------- wrapper
@jax.jit
def vae_forward(x, eps, w_pack, vec_pack):
    vmem = pl.BlockSpec(memory_space=pltpu.MemorySpace.VMEM)
    recon, z, mu, lv = pl.pallas_call(
        vae_kernel,
        out_shape=(
            jax.ShapeDtypeStruct((BATCH, N_INPUT), jnp.float32),    # recon
            jax.ShapeDtypeStruct((BATCH, N_LATENT), jnp.float32),   # z
            jax.ShapeDtypeStruct((BATCH, N_LATENT), jnp.float32),   # mu
            jax.ShapeDtypeStruct((BATCH, N_LATENT), jnp.float32),   # logvar
        ),
        in_specs=[vmem, vmem, vmem, vmem],
        out_specs=(vmem, vmem, vmem, vmem),
        cost_estimate=pl.CostEstimate(
            flops=83_456, transcendentals=768, bytes_accessed=51_456),
    )(x, eps, w_pack, vec_pack)
    return recon, z, mu, lv


# ----------------------------------------------------------------------------- reference
def reference_forward(x, eps, raw):
    """Pure-JAX reference (two-pass BN), used only to validate the kernel."""
    def bn(y, g, b):
        m = jnp.mean(y, axis=0, keepdims=True)
        v = jnp.mean((y - m) ** 2, axis=0, keepdims=True)
        return (y - m) / jnp.sqrt(v + BN_EPS) * g + b

    def blk(h, p):
        w, b, g, be = p
        return bn(jnp.maximum(h @ w + b, 0.0), g, be)

    h = blk(x, raw["e1"])
    h = blk(h, raw["e2"])
    mu = blk(h, raw["mu"])
    lv = blk(h, raw["var"])
    z = eps * jnp.exp(0.5 * lv) + mu
    d = blk(z, raw["dl"])
    d = blk(d, raw["d2"])
    w, b = raw["d1"]
    recon = jax.nn.sigmoid(d @ w + b)
    return recon, z, mu, lv


# ----------------------------------------------------------------------------- main
if __name__ == "__main__":
    root = jax.random.PRNGKey(0)
    k_x, k_eps, k_params = jax.random.split(root, 3)

    x = jax.random.uniform(k_x, (BATCH, N_INPUT), jnp.float32)      # data in [0,1]
    eps = jax.random.normal(k_eps, (BATCH, N_LATENT), jnp.float32)  # reparam noise
    raw, w_pack, vec_pack = init_params(k_params)

    recon, z, mu, logvar = vae_forward(x, eps, w_pack, vec_pack)
    jax.block_until_ready((recon, z, mu, logvar))

    # shape / sanity checks
    assert recon.shape == (BATCH, N_INPUT)
    assert z.shape == (BATCH, N_LATENT)
    assert mu.shape == (BATCH, N_LATENT)
    assert logvar.shape == (BATCH, N_LATENT)
    assert bool(jnp.all(jnp.isfinite(recon)))
    assert bool(jnp.all((recon >= 0.0) & (recon <= 1.0)))

    # numerical check against pure-JAX reference
    r_recon, r_z, r_mu, r_lv = reference_forward(x, eps, raw)
    for got, ref in ((recon, r_recon), (z, r_z), (mu, r_mu), (logvar, r_lv)):
        assert bool(jnp.allclose(got, ref, atol=1e-4, rtol=1e-4))

    print("KERNEL_OK")
</pallas_src>

<mosaic_0001>
module attributes {stable_mosaic.version = 11 : i64} {
  func.func @vae_kernel(%arg0: memref<8x64xf32, #tpu.memory_space<vmem>>, %arg1: memref<8x2xf32, #tpu.memory_space<vmem>>, %arg2: memref<168x64xf32, #tpu.memory_space<vmem>>, %arg3: memref<16x64xf32, #tpu.memory_space<vmem>>, %arg4: memref<8x64xf32, #tpu.memory_space<vmem>>, %arg5: memref<8x2xf32, #tpu.memory_space<vmem>>, %arg6: memref<8x2xf32, #tpu.memory_space<vmem>>, %arg7: memref<8x2xf32, #tpu.memory_space<vmem>>) attributes {dimension_semantics = [], scalar_prefetch = 0 : i64, scratch_operands = 0 : i64, tpu.core_type = #tpu.core_type<tc>} {
    %c0 = arith.constant 0 : index
    %c0_0 = arith.constant 0 : index
    %0 = vector.load %arg0[%c0, %c0_0] : memref<8x64xf32, #tpu.memory_space<vmem>>, vector<8x64xf32>
    %c0_1 = arith.constant 0 : index
    %c0_2 = arith.constant 0 : index
    %1 = vector.load %arg1[%c0_1, %c0_2] : memref<8x2xf32, #tpu.memory_space<vmem>>, vector<8x2xf32>
    %c0_3 = arith.constant 0 : index
    %c0_4 = arith.constant 0 : index
    %2 = vector.load %arg2[%c0_3, %c0_4] : memref<168x64xf32, #tpu.memory_space<vmem>>, vector<64x32xf32>
    %c0_5 = arith.constant 0 : index
    %c0_6 = arith.constant 0 : index
    %3 = vector.load %arg3[%c0_5, %c0_6] : memref<16x64xf32, #tpu.memory_space<vmem>>, vector<1x32xf32>
    %cst = arith.constant dense<0.000000e+00> : vector<8x32xf32>
    %4 = tpu.matmul %0, %2, %cst {dimension_numbers = #tpu.dot_dimension_numbers<[1], [0], [0], [1], [0, 0, 1, 1], [], []>} : vector<8x64xf32>, vector<64x32xf32>, vector<8x32xf32> -> vector<8x32xf32>
    %5 = vector.broadcast %3 : vector<1x32xf32> to vector<8x32xf32>
    %6 = arith.addf %4, %5 : vector<8x32xf32>
    %cst_7 = arith.constant 0.000000e+00 : f32
    %7 = vector.broadcast %cst_7 : f32 to vector<8x32xf32>
    %8 = arith.maximumf %6, %7 : vector<8x32xf32>
    %9 = arith.mulf %8, %8 : vector<8x32xf32>
    %10 = tpu.concatenate %8, %9 in 1 : vector<8x32xf32>, vector<8x32xf32> -> vector<8x64xf32>
    %cst_8 = arith.constant dense<0.000000e+00> : vector<64xf32>
    %11 = vector.multi_reduction <add>, %10, %cst_8 [0] : vector<8x64xf32> to vector<64xf32>
    %12 = vector.shape_cast %11 : vector<64xf32> to vector<1x64xf32>
    %13 = vector.extract_strided_slice %12 {offsets = [0, 0], sizes = [1, 32], strides = [1, 1]} : vector<1x64xf32> to vector<1x32xf32>
    %cst_9 = arith.constant 1.250000e-01 : f32
    %14 = vector.broadcast %cst_9 : f32 to vector<1x32xf32>
    %15 = arith.mulf %13, %14 : vector<1x32xf32>
    %16 = vector.extract_strided_slice %12 {offsets = [0, 32], sizes = [1, 32], strides = [1, 1]} : vector<1x64xf32> to vector<1x32xf32>
    %cst_10 = arith.constant 1.250000e-01 : f32
    %17 = vector.broadcast %cst_10 : f32 to vector<1x32xf32>
    %18 = arith.mulf %16, %17 : vector<1x32xf32>
    %19 = arith.mulf %15, %15 : vector<1x32xf32>
    %20 = arith.subf %18, %19 : vector<1x32xf32>
    %cst_11 = arith.constant 0.000000e+00 : f32
    %21 = vector.broadcast %cst_11 : f32 to vector<1x32xf32>
    %22 = arith.maximumf %20, %21 : vector<1x32xf32>
    %c1 = arith.constant 1 : index
    %c0_12 = arith.constant 0 : index
    %23 = vector.load %arg3[%c1, %c0_12] : memref<16x64xf32, #tpu.memory_space<vmem>>, vector<1x32xf32>
    %c2 = arith.constant 2 : index
    %c0_13 = arith.constant 0 : index
    %24 = vector.load %arg3[%c2, %c0_13] : memref<16x64xf32, #tpu.memory_space<vmem>>, vector<1x32xf32>
    %cst_14 = arith.constant 9.99999974E-6 : f32
    %25 = vector.broadcast %cst_14 : f32 to vector<1x32xf32>
    %26 = arith.addf %22, %25 : vector<1x32xf32>
    %27 = math.rsqrt %26 : vector<1x32xf32>
    %28 = arith.mulf %27, %23 : vector<1x32xf32>
    %29 = arith.mulf %15, %28 : vector<1x32xf32>
    %30 = arith.subf %24, %29 : vector<1x32xf32>
    %31 = vector.broadcast %28 : vector<1x32xf32> to vector<8x32xf32>
    %32 = arith.mulf %8, %31 : vector<8x32xf32>
    %33 = vector.broadcast %30 : vector<1x32xf32> to vector<8x32xf32>
    %34 = arith.addf %32, %33 : vector<8x32xf32>
    %c64 = arith.constant 64 : index
    %c0_15 = arith.constant 0 : index
    %35 = vector.load %arg2[%c64, %c0_15] : memref<168x64xf32, #tpu.memory_space<vmem>>, vector<32x16xf32>
    %c3 = arith.constant 3 : index
    %c0_16 = arith.constant 0 : index
    %36 = vector.load %arg3[%c3, %c0_16] : memref<16x64xf32, #tpu.memory_space<vmem>>, vector<1x16xf32>
    %cst_17 = arith.constant dense<0.000000e+00> : vector<8x16xf32>
    %37 = tpu.matmul %34, %35, %cst_17 {dimension_numbers = #tpu.dot_dimension_numbers<[1], [0], [0], [1], [0, 0, 1, 1], [], []>} : vector<8x32xf32>, vector<32x16xf32>, vector<8x16xf32> -> vector<8x16xf32>
    %38 = vector.broadcast %36 : vector<1x16xf32> to vector<8x16xf32>
    %39 = arith.addf %37, %38 : vector<8x16xf32>
    %cst_18 = arith.constant 0.000000e+00 : f32
    %40 = vector.broadcast %cst_18 : f32 to vector<8x16xf32>
    %41 = arith.maximumf %39, %40 : vector<8x16xf32>
    %42 = arith.mulf %41, %41 : vector<8x16xf32>
    %43 = tpu.concatenate %41, %42 in 1 : vector<8x16xf32>, vector<8x16xf32> -> vector<8x32xf32>
    %cst_19 = arith.constant dense<0.000000e+00> : vector<32xf32>
    %44 = vector.multi_reduction <add>, %43, %cst_19 [0] : vector<8x32xf32> to vector<32xf32>
    %45 = vector.shape_cast %44 : vector<32xf32> to vector<1x32xf32>
    %46 = vector.extract_strided_slice %45 {offsets = [0, 0], sizes = [1, 16], strides = [1, 1]} : vector<1x32xf32> to vector<1x16xf32>
    %cst_20 = arith.constant 1.250000e-01 : f32
    %47 = vector.broadcast %cst_20 : f32 to vector<1x16xf32>
    %48 = arith.mulf %46, %47 : vector<1x16xf32>
    %49 = vector.extract_strided_slice %45 {offsets = [0, 16], sizes = [1, 16], strides = [1, 1]} : vector<1x32xf32> to vector<1x16xf32>
    %cst_21 = arith.constant 1.250000e-01 : f32
    %50 = vector.broadcast %cst_21 : f32 to vector<1x16xf32>
    %51 = arith.mulf %49, %50 : vector<1x16xf32>
    %52 = arith.mulf %48, %48 : vector<1x16xf32>
    %53 = arith.subf %51, %52 : vector<1x16xf32>
    %cst_22 = arith.constant 0.000000e+00 : f32
    %54 = vector.broadcast %cst_22 : f32 to vector<1x16xf32>
    %55 = arith.maximumf %53, %54 : vector<1x16xf32>
    %c4 = arith.constant 4 : index
    %c0_23 = arith.constant 0 : index
    %56 = vector.load %arg3[%c4, %c0_23] : memref<16x64xf32, #tpu.memory_space<vmem>>, vector<1x16xf32>
    %c5 = arith.constant 5 : index
    %c0_24 = arith.constant 0 : index
    %57 = vector.load %arg3[%c5, %c0_24] : memref<16x64xf32, #tpu.memory_space<vmem>>, vector<1x16xf32>
    %cst_25 = arith.constant 9.99999974E-6 : f32
    %58 = vector.broadcast %cst_25 : f32 to vector<1x16xf32>
    %59 = arith.addf %55, %58 : vector<1x16xf32>
    %60 = math.rsqrt %59 : vector<1x16xf32>
    %61 = arith.mulf %60, %56 : vector<1x16xf32>
    %62 = arith.mulf %48, %61 : vector<1x16xf32>
    %63 = arith.subf %57, %62 : vector<1x16xf32>
    %64 = vector.broadcast %61 : vector<1x16xf32> to vector<8x16xf32>
    %65 = arith.mulf %41, %64 : vector<8x16xf32>
    %66 = vector.broadcast %63 : vector<1x16xf32> to vector<8x16xf32>
    %67 = arith.addf %65, %66 : vector<8x16xf32>
    %c96 = arith.constant 96 : index
    %c0_26 = arith.constant 0 : index
    %68 = vector.load %arg2[%c96, %c0_26] : memref<168x64xf32, #tpu.memory_space<vmem>>, vector<16x4xf32>
    %c6 = arith.constant 6 : index
    %c0_27 = arith.constant 0 : index
    %69 = vector.load %arg3[%c6, %c0_27] : memref<16x64xf32, #tpu.memory_space<vmem>>, vector<1x4xf32>
    %cst_28 = arith.constant dense<0.000000e+00> : vector<8x4xf32>
    %70 = tpu.matmul %67, %68, %cst_28 {dimension_numbers = #tpu.dot_dimension_numbers<[1], [0], [0], [1], [0, 0, 1, 1], [], []>} : vector<8x16xf32>, vector<16x4xf32>, vector<8x4xf32> -> vector<8x4xf32>
    %71 = vector.broadcast %69 : vector<1x4xf32> to vector<8x4xf32>
    %72 = arith.addf %70, %71 : vector<8x4xf32>
    %cst_29 = arith.constant 0.000000e+00 : f32
    %73 = vector.broadcast %cst_29 : f32 to vector<8x4xf32>
    %74 = arith.maximumf %72, %73 : vector<8x4xf32>
    %75 = arith.mulf %74, %74 : vector<8x4xf32>
    %76 = tpu.concatenate %74, %75 in 1 : vector<8x4xf32>, vector<8x4xf32> -> vector<8x8xf32>
    %cst_30 = arith.constant dense<0.000000e+00> : vector<8xf32>
    %77 = vector.multi_reduction <add>, %76, %cst_30 [0] : vector<8x8xf32> to vector<8xf32>
    %78 = vector.shape_cast %77 : vector<8xf32> to vector<1x8xf32>
    %79 = vector.extract_strided_slice %78 {offsets = [0, 0], sizes = [1, 4], strides = [1, 1]} : vector<1x8xf32> to vector<1x4xf32>
    %cst_31 = arith.constant 1.250000e-01 : f32
    %80 = vector.broadcast %cst_31 : f32 to vector<1x4xf32>
    %81 = arith.mulf %79, %80 : vector<1x4xf32>
    %82 = vector.extract_strided_slice %78 {offsets = [0, 4], sizes = [1, 4], strides = [1, 1]} : vector<1x8xf32> to vector<1x4xf32>
    %cst_32 = arith.constant 1.250000e-01 : f32
    %83 = vector.broadcast %cst_32 : f32 to vector<1x4xf32>
    %84 = arith.mulf %82, %83 : vector<1x4xf32>
    %85 = arith.mulf %81, %81 : vector<1x4xf32>
    %86 = arith.subf %84, %85 : vector<1x4xf32>
    %cst_33 = arith.constant 0.000000e+00 : f32
    %87 = vector.broadcast %cst_33 : f32 to vector<1x4xf32>
    %88 = arith.maximumf %86, %87 : vector<1x4xf32>
    %c7 = arith.constant 7 : index
    %c0_34 = arith.constant 0 : index
    %89 = vector.load %arg3[%c7, %c0_34] : memref<16x64xf32, #tpu.memory_space<vmem>>, vector<1x4xf32>
    %c8 = arith.constant 8 : index
    %c0_35 = arith.constant 0 : index
    %90 = vector.load %arg3[%c8, %c0_35] : memref<16x64xf32, #tpu.memory_space<vmem>>, vector<1x4xf32>
    %cst_36 = arith.constant 9.99999974E-6 : f32
    %91 = vector.broadcast %cst_36 : f32 to vector<1x4xf32>
    %92 = arith.addf %88, %91 : vector<1x4xf32>
    %93 = math.rsqrt %92 : vector<1x4xf32>
    %94 = arith.mulf %93, %89 : vector<1x4xf32>
    %95 = arith.mulf %81, %94 : vector<1x4xf32>
    %96 = arith.subf %90, %95 : vector<1x4xf32>
    %97 = vector.broadcast %94 : vector<1x4xf32> to vector<8x4xf32>
    %98 = arith.mulf %74, %97 : vector<8x4xf32>
    %99 = vector.broadcast %96 : vector<1x4xf32> to vector<8x4xf32>
    %100 = arith.addf %98, %99 : vector<8x4xf32>
    %101 = vector.extract_strided_slice %100 {offsets = [0, 0], sizes = [8, 2], strides = [1, 1]} : vector<8x4xf32> to vector<8x2xf32>
    %102 = vector.extract_strided_slice %100 {offsets = [0, 2], sizes = [8, 2], strides = [1, 1]} : vector<8x4xf32> to vector<8x2xf32>
    %cst_37 = arith.constant 5.000000e-01 : f32
    %103 = vector.broadcast %cst_37 : f32 to vector<8x2xf32>
    %104 = arith.mulf %103, %102 : vector<8x2xf32>
    %105 = math.exp %104 : vector<8x2xf32>
    %106 = arith.mulf %1, %105 : vector<8x2xf32>
    %107 = arith.addf %106, %101 : vector<8x2xf32>
    %c112 = arith.constant 112 : index
    %c0_38 = arith.constant 0 : index
    %108 = vector.load %arg2[%c112, %c0_38] : memref<168x64xf32, #tpu.memory_space<vmem>>, vector<1x16xf32>
    %c113 = arith.constant 113 : index
    %c0_39 = arith.constant 0 : index
    %109 = vector.load %arg2[%c113, %c0_39] : memref<168x64xf32, #tpu.memory_space<vmem>>, vector<1x16xf32>
    %c9 = arith.constant 9 : index
    %c0_40 = arith.constant 0 : index
    %110 = vector.load %arg3[%c9, %c0_40] : memref<16x64xf32, #tpu.memory_space<vmem>>, vector<1x16xf32>
    %111 = vector.extract_strided_slice %107 {offsets = [0, 0], sizes = [8, 1], strides = [1, 1]} : vector<8x2xf32> to vector<8x1xf32>
    %112 = vector.broadcast %111 : vector<8x1xf32> to vector<8x16xf32>
    %113 = vector.broadcast %108 : vector<1x16xf32> to vector<8x16xf32>
    %114 = arith.mulf %112, %113 : vector<8x16xf32>
    %115 = vector.extract_strided_slice %107 {offsets = [0, 1], sizes = [8, 1], strides = [1, 1]} : vector<8x2xf32> to vector<8x1xf32>
    %116 = vector.broadcast %115 : vector<8x1xf32> to vector<8x16xf32>
    %117 = vector.broadcast %109 : vector<1x16xf32> to vector<8x16xf32>
    %118 = arith.mulf %116, %117 : vector<8x16xf32>
    %119 = arith.addf %114, %118 : vector<8x16xf32>
    %120 = vector.broadcast %110 : vector<1x16xf32> to vector<8x16xf32>
    %121 = arith.addf %119, %120 : vector<8x16xf32>
    %cst_41 = arith.constant 0.000000e+00 : f32
    %122 = vector.broadcast %cst_41 : f32 to vector<8x16xf32>
    %123 = arith.maximumf %121, %122 : vector<8x16xf32>
    %124 = arith.mulf %123, %123 : vector<8x16xf32>
    %125 = tpu.concatenate %123, %124 in 1 : vector<8x16xf32>, vector<8x16xf32> -> vector<8x32xf32>
    %cst_42 = arith.constant dense<0.000000e+00> : vector<32xf32>
    %126 = vector.multi_reduction <add>, %125, %cst_42 [0] : vector<8x32xf32> to vector<32xf32>
    %127 = vector.shape_cast %126 : vector<32xf32> to vector<1x32xf32>
    %128 = vector.extract_strided_slice %127 {offsets = [0, 0], sizes = [1, 16], strides = [1, 1]} : vector<1x32xf32> to vector<1x16xf32>
    %cst_43 = arith.constant 1.250000e-01 : f32
    %129 = vector.broadcast %cst_43 : f32 to vector<1x16xf32>
    %130 = arith.mulf %128, %129 : vector<1x16xf32>
    %131 = vector.extract_strided_slice %127 {offsets = [0, 16], sizes = [1, 16], strides = [1, 1]} : vector<1x32xf32> to vector<1x16xf32>
    %cst_44 = arith.constant 1.250000e-01 : f32
    %132 = vector.broadcast %cst_44 : f32 to vector<1x16xf32>
    %133 = arith.mulf %131, %132 : vector<1x16xf32>
    %134 = arith.mulf %130, %130 : vector<1x16xf32>
    %135 = arith.subf %133, %134 : vector<1x16xf32>
    %cst_45 = arith.constant 0.000000e+00 : f32
    %136 = vector.broadcast %cst_45 : f32 to vector<1x16xf32>
    %137 = arith.maximumf %135, %136 : vector<1x16xf32>
    %c10 = arith.constant 10 : index
    %c0_46 = arith.constant 0 : index
    %138 = vector.load %arg3[%c10, %c0_46] : memref<16x64xf32, #tpu.memory_space<vmem>>, vector<1x16xf32>
    %c11 = arith.constant 11 : index
    %c0_47 = arith.constant 0 : index
    %139 = vector.load %arg3[%c11, %c0_47] : memref<16x64xf32, #tpu.memory_space<vmem>>, vector<1x16xf32>
    %cst_48 = arith.constant 9.99999974E-6 : f32
    %140 = vector.broadcast %cst_48 : f32 to vector<1x16xf32>
    %141 = arith.addf %137, %140 : vector<1x16xf32>
    %142 = math.rsqrt %141 : vector<1x16xf32>
    %143 = arith.mulf %142, %138 : vector<1x16xf32>
    %144 = arith.mulf %130, %143 : vector<1x16xf32>
    %145 = arith.subf %139, %144 : vector<1x16xf32>
    %146 = vector.broadcast %143 : vector<1x16xf32> to vector<8x16xf32>
    %147 = arith.mulf %123, %146 : vector<8x16xf32>
    %148 = vector.broadcast %145 : vector<1x16xf32> to vector<8x16xf32>
    %149 = arith.addf %147, %148 : vector<8x16xf32>
    %c120 = arith.constant 120 : index
    %c0_49 = arith.constant 0 : index
    %150 = vector.load %arg2[%c120, %c0_49] : memref<168x64xf32, #tpu.memory_space<vmem>>, vector<16x32xf32>
    %c12 = arith.constant 12 : index
    %c0_50 = arith.constant 0 : index
    %151 = vector.load %arg3[%c12, %c0_50] : memref<16x64xf32, #tpu.memory_space<vmem>>, vector<1x32xf32>
    %cst_51 = arith.constant dense<0.000000e+00> : vector<8x32xf32>
    %152 = tpu.matmul %149, %150, %cst_51 {dimension_numbers = #tpu.dot_dimension_numbers<[1], [0], [0], [1], [0, 0, 1, 1], [], []>} : vector<8x16xf32>, vector<16x32xf32>, vector<8x32xf32> -> vector<8x32xf32>
    %153 = vector.broadcast %151 : vector<1x32xf32> to vector<8x32xf32>
    %154 = arith.addf %152, %153 : vector<8x32xf32>
    %cst_52 = arith.constant 0.000000e+00 : f32
    %155 = vector.broadcast %cst_52 : f32 to vector<8x32xf32>
    %156 = arith.maximumf %154, %155 : vector<8x32xf32>
    %157 = arith.mulf %156, %156 : vector<8x32xf32>
    %158 = tpu.concatenate %156, %157 in 1 : vector<8x32xf32>, vector<8x32xf32> -> vector<8x64xf32>
    %cst_53 = arith.constant dense<0.000000e+00> : vector<64xf32>
    %159 = vector.multi_reduction <add>, %158, %cst_53 [0] : vector<8x64xf32> to vector<64xf32>
    %160 = vector.shape_cast %159 : vector<64xf32> to vector<1x64xf32>
    %161 = vector.extract_strided_slice %160 {offsets = [0, 0], sizes = [1, 32], strides = [1, 1]} : vector<1x64xf32> to vector<1x32xf32>
    %cst_54 = arith.constant 1.250000e-01 : f32
    %162 = vector.broadcast %cst_54 : f32 to vector<1x32xf32>
    %163 = arith.mulf %161, %162 : vector<1x32xf32>
    %164 = vector.extract_strided_slice %160 {offsets = [0, 32], sizes = [1, 32], strides = [1, 1]} : vector<1x64xf32> to vector<1x32xf32>
    %cst_55 = arith.constant 1.250000e-01 : f32
    %165 = vector.broadcast %cst_55 : f32 to vector<1x32xf32>
    %166 = arith.mulf %164, %165 : vector<1x32xf32>
    %167 = arith.mulf %163, %163 : vector<1x32xf32>
    %168 = arith.subf %166, %167 : vector<1x32xf32>
    %cst_56 = arith.constant 0.000000e+00 : f32
    %169 = vector.broadcast %cst_56 : f32 to vector<1x32xf32>
    %170 = arith.maximumf %168, %169 : vector<1x32xf32>
    %c13 = arith.constant 13 : index
    %c0_57 = arith.constant 0 : index
    %171 = vector.load %arg3[%c13, %c0_57] : memref<16x64xf32, #tpu.memory_space<vmem>>, vector<1x32xf32>
    %c14 = arith.constant 14 : index
    %c0_58 = arith.constant 0 : index
    %172 = vector.load %arg3[%c14, %c0_58] : memref<16x64xf32, #tpu.memory_space<vmem>>, vector<1x32xf32>
    %cst_59 = arith.constant 9.99999974E-6 : f32
    %173 = vector.broadcast %cst_59 : f32 to vector<1x32xf32>
    %174 = arith.addf %170, %173 : vector<1x32xf32>
    %175 = math.rsqrt %174 : vector<1x32xf32>
    %176 = arith.mulf %175, %171 : vector<1x32xf32>
    %177 = arith.mulf %163, %176 : vector<1x32xf32>
    %178 = arith.subf %172, %177 : vector<1x32xf32>
    %179 = vector.broadcast %176 : vector<1x32xf32> to vector<8x32xf32>
    %180 = arith.mulf %156, %179 : vector<8x32xf32>
    %181 = vector.broadcast %178 : vector<1x32xf32> to vector<8x32xf32>
    %182 = arith.addf %180, %181 : vector<8x32xf32>
    %c136 = arith.constant 136 : index
    %c0_60 = arith.constant 0 : index
    %183 = vector.load %arg2[%c136, %c0_60] : memref<168x64xf32, #tpu.memory_space<vmem>>, vector<32x64xf32>
    %c15 = arith.constant 15 : index
    %c0_61 = arith.constant 0 : index
    %184 = vector.load %arg3[%c15, %c0_61] : memref<16x64xf32, #tpu.memory_space<vmem>>, vector<1x64xf32>
    %cst_62 = arith.constant dense<0.000000e+00> : vector<8x64xf32>
    %185 = tpu.matmul %182, %183, %cst_62 {dimension_numbers = #tpu.dot_dimension_numbers<[1], [0], [0], [1], [0, 0, 1, 1], [], []>} : vector<8x32xf32>, vector<32x64xf32>, vector<8x64xf32> -> vector<8x64xf32>
    %186 = vector.broadcast %184 : vector<1x64xf32> to vector<8x64xf32>
    %187 = arith.addf %185, %186 : vector<8x64xf32>
    %188 = arith.negf %187 : vector<8x64xf32>
    %189 = math.exp %188 : vector<8x64xf32>
    %cst_63 = arith.constant 1.000000e+00 : f32
    %190 = vector.broadcast %cst_63 : f32 to vector<8x64xf32>
    %191 = arith.addf %190, %189 : vector<8x64xf32>
    %192 = arith.divf %190, %191 : vector<8x64xf32>
    %c0_64 = arith.constant 0 : index
    %c0_65 = arith.constant 0 : index
    %193 = vector.load %arg4[%c0_64, %c0_65] : memref<8x64xf32, #tpu.memory_space<vmem>>, vector<8x64xf32>
    tpu.vector_store %arg4[%c0_64, %c0_65], %192 {strides = array<i32>} : memref<8x64xf32, #tpu.memory_space<vmem>>, vector<8x64xf32>,
    %c0_66 = arith.constant 0 : index
    %c0_67 = arith.constant 0 : index
    %194 = vector.load %arg5[%c0_66, %c0_67] : memref<8x2xf32, #tpu.memory_space<vmem>>, vector<8x2xf32>
    tpu.vector_store %arg5[%c0_66, %c0_67], %107 {strides = array<i32>} : memref<8x2xf32, #tpu.memory_space<vmem>>, vector<8x2xf32>,
    %c0_68 = arith.constant 0 : index
    %c0_69 = arith.constant 0 : index
    %195 = vector.load %arg6[%c0_68, %c0_69] : memref<8x2xf32, #tpu.memory_space<vmem>>, vector<8x2xf32>
    tpu.vector_store %arg6[%c0_68, %c0_69], %101 {strides = array<i32>} : memref<8x2xf32, #tpu.memory_space<vmem>>, vector<8x2xf32>,
    %c0_70 = arith.constant 0 : index
    %c0_71 = arith.constant 0 : index
    %196 = vector.load %arg7[%c0_70, %c0_71] : memref<8x2xf32, #tpu.memory_space<vmem>>, vector<8x2xf32>
    tpu.vector_store %arg7[%c0_70, %c0_71], %102 {strides = array<i32>} : memref<8x2xf32, #tpu.memory_space<vmem>>, vector<8x2xf32>,
    return
  }
}

</mosaic_0001>

<llo_original>
// kernel: vae_forward.1
$region0: #{vae_forward.1}
  #allocation0 [shape = 'u32[]', space=smem, size = 0x4, offset = 0x4, fixed_abs, tag = 'smem constant byte address 0x4 - core index']
  #allocation1 [shape = 'u32[144,128]{1,0:T(1,128)}', space=vmem, size = 0x12000, scoped, tag = 'internal scratch']
  %s0 = inlined_call_operand.vmem [shape: f32[8,64], index: 0, kind: input, shape index: {}]
  %s1 = inlined_call_operand.vmem [shape: f32[8,2], index: 1, kind: input, shape index: {}]
  %s2 = inlined_call_operand.vmem [shape: f32[168,64], index: 2, kind: input, shape index: {}]
  %s3 = inlined_call_operand.vmem [shape: f32[16,64], index: 3, kind: input, shape index: {}]
  %s4 = inlined_call_operand.hbm [shape: f32[8,64], index: 4, kind: output, shape index: {0}]
  %s5 = inlined_call_operand.vmem [shape: f32[8,2], index: 5, kind: output, shape index: {1}]
  %s6 = inlined_call_operand.vmem [shape: f32[8,2], index: 6, kind: output, shape index: {2}]
  %s7 = inlined_call_operand.vmem [shape: f32[8,2], index: 7, kind: output, shape index: {3}]
  %8 = xla_tuple %s4, %s5, %s6, %s7
  %s9 = sld [smem:[#allocation0]]
  $region50: #{vae_forward.1} parent=0
    _
  %s11 = ssub.s32 1, %s9
  %s12 = scalar_select 0, %s11, %s9
  $region1: #{vae_forward.1} parent=0
    #allocation2 [shape = 'u8[4096]{0}', space=vmem, size = 0x1000, scoped, tag = 'output window, operand 0, single buffered']
    #allocation3 [shape = 's32[1]{0}', space=sflag, size = 0x4, scoped, tag = 'scoped memory for vae_forward.1']
    %13 = vsyncpa [#allocation3], 0
    // Predicated region
    $region2: #{vae_forward.1} parent=1 // pred_check
      _
    $region3: #{vae_forward.1} parent=1 // pred_check_branch
      %15 = sbr.rel (0) target = $region5
    $region4: #{vae_forward.1} parent=1 // pred_region
      _
    $region5: #{vae_forward.1} parent=1 // pred_fallthru
      _
    // Predicated region
    $region6: #{vae_forward.1} parent=1 // pred_check
      _
    $region7: #{vae_forward.1} parent=1 // pred_check_branch
      %17 = sbr.rel (0) target = $region9
    $region8: #{vae_forward.1} parent=1 // pred_region
      _
    $region9: #{vae_forward.1} parent=1 // pred_fallthru
      _
    // Predicated region
    $region10: #{vae_forward.1} parent=1 // pred_check
      _
    $region11: #{vae_forward.1} parent=1 // pred_check_branch
      %19 = sbr.rel (0) target = $region13
    $region12: #{vae_forward.1} parent=1 // pred_region
      _
    $region13: #{vae_forward.1} parent=1 // pred_fallthru
      _
    // Predicated region
    $region14: #{vae_forward.1} parent=1 // pred_check
      _
    $region15: #{vae_forward.1} parent=1 // pred_check_branch
      %21 = sbr.rel (0) target = $region17
    $region16: #{vae_forward.1} parent=1 // pred_region
      _
    $region17: #{vae_forward.1} parent=1 // pred_fallthru
      _
    %v22 = vld [vmem:[%s0] sm:$0xff]
    %v23 = vld [vmem:[%s1] sm:$0xff]
    %v24 = vld [vmem:[%s2] sm:$0xff]
    %v25 = vld [vmem:[%s2 + $0x8] sm:$0xff]
    %v26 = vld [vmem:[%s2 + $0x10] sm:$0xff]
    %v27 = vld [vmem:[%s2 + $0x18] sm:$0xff]
    %v28 = vld [vmem:[%s2 + $0x20] sm:$0xff]
    %v29 = vld [vmem:[%s2 + $0x28] sm:$0xff]
    %v30 = vld [vmem:[%s2 + $0x30] sm:$0xff]
    %v31 = vld [vmem:[%s2 + $0x38] sm:$0xff]
    %v32 = vld [vmem:[%s3] sm:$0x1]
    %v33 = vlaneseq
    %v34 = vshrl.u32 %v33, 7
    %v35 = vsub.s32 0, %v34
    %v36 = vrot.slane %v32, %v35
    %vm37 = vcmask 523264
    %v39 = vsel %vm37, %v22, 0
    %41 = vmatprep.subr.mxu0 0.0
    %42 = vmatpush1.msra.mxu0 0.0
    %43 = vmatprep.subr.mxu0 0.0
    %44 = vmatpush1.msra.mxu0 0.0
    %45 = vmatprep.subr.mxu0 0.0
    %46 = vmatpush1.msra.mxu0 0.0
    %47 = vmatprep.subr.mxu0 0.0
    %48 = vmatpush1.msra.mxu0 0.0
    %49 = vmatprep.subr.mxu0 0.0
    %50 = vmatpush1.msra.mxu0 0.0
    %51 = vmatprep.subr.mxu0 0.0
    %52 = vmatpush1.msra.mxu0 0.0
    %53 = vmatprep.subr.mxu0 0.0
    %54 = vmatpush1.msra.mxu0 0.0
    %55 = vmatprep.subr.mxu0 0.0
    %56 = vmatpush1.msra.mxu0 0.0
    %57 = vmatprep.subr.mxu0 0.0
    %58 = vmatpush1.msra.mxu0 %v31
    %59 = vmatprep.subr.mxu0 0.0
    %60 = vmatpush1.msra.mxu0 %v30
    %61 = vmatprep.subr.mxu0 0.0
    %62 = vmatpush1.msra.mxu0 %v29
    %63 = vmatprep.subr.mxu0 0.0
    %64 = vmatpush1.msra.mxu0 %v28
    %65 = vmatprep.subr.mxu0 0.0
    %66 = vmatpush1.msra.mxu0 %v27
    %67 = vmatprep.subr.mxu0 0.0
    %68 = vmatpush1.msra.mxu0 %v26
    %69 = vmatprep.subr.mxu0 0.0
    %70 = vmatpush1.msra.mxu0 %v25
    %71 = vmatprep.subr.mxu0 0.0
    %72 = vmatpush1.msra.mxu0 %v24
    %73 = vmatprep.subr.mxu0 0.0
    %74 = vmatpush2.msra.mxu0 0.0
    %75 = vmatprep.subr.mxu0 0.0
    %76 = vmatpush2.msra.mxu0 0.0
    %77 = vmatprep.subr.mxu0 0.0
    %78 = vmatpush2.msra.mxu0 0.0
    %79 = vmatprep.subr.mxu0 0.0
    %80 = vmatpush2.msra.mxu0 0.0
    %81 = vmatprep.subr.mxu0 0.0
    %82 = vmatpush2.msra.mxu0 0.0
    %83 = vmatprep.subr.mxu0 0.0
    %84 = vmatpush2.msra.mxu0 0.0
    %85 = vmatprep.subr.mxu0 0.0
    %86 = vmatpush2.msra.mxu0 0.0
    %87 = vmatprep.subr.mxu0 0.0
    %88 = vmatpush2.msra.mxu0 0.0
    %89 = vmatprep.subr.mxu0 0.0
    %90 = vmatpush2.msra.mxu0 0.0
    %91 = vmatprep.subr.mxu0 0.0
    %92 = vmatpush2.msra.mxu0 0.0
    %93 = vmatprep.subr.mxu0 0.0
    %94 = vmatpush2.msra.mxu0 0.0
    %95 = vmatprep.subr.mxu0 0.0
    %96 = vmatpush2.msra.mxu0 0.0
    %97 = vmatprep.subr.mxu0 0.0
    %98 = vmatpush2.msra.mxu0 0.0
    %99 = vmatprep.subr.mxu0 0.0
    %100 = vmatpush2.msra.mxu0 0.0
    %101 = vmatprep.subr.mxu0 0.0
    %102 = vmatpush2.msra.mxu0 0.0
    %103 = vmatprep.subr.mxu0 0.0
    %104 = vmatpush2.msra.mxu0 0.0
    %105 = vmatprep.mubr.f32.mxu0 0.0
    %106 = vmatmul.mubr.f32.gmra.mxu0 %v39
    %v107 = vpop.f32.mrf.mxu0
    %v108 = vadd.f32 %v36, %v107
    %v109 = vpop.f32.mrf.mxu0
    %110 = vdwg.mxu0
    %v111 = vmax.f32 %v108, 0.0
    %v112 = vmul.f32 %v111, %v111
    %114 = vrot.lane.b32.xlu0 %v112, 32
    %v115 = vpop.permute.xlu0 %114
    %vm117 = vcmask 261120
    %v118 = vsel %vm117, %v111, %v115
    %v119 = vsel %vm37, %v118, 0.0
    %v120 = vrot.slane %v119, 4
    %v121 = vadd.f32 %v119, %v120
    %v122 = vrot.slane %v121, 2
    %v123 = vadd.f32 %v121, %v122
    %v124 = vrot.slane %v123, 1
    %v125 = vadd.f32 %v123, %v124
    %v126 = vmul.f32 %v125, 0.125
    %v127 = vmul.f32 %v126, %v126
    %129 = vrot.lane.b32.xlu0 %v127, 32
    %v130 = vpop.permute.xlu0 %129
    %v132 = vsub.f32 %v126, %v130
    %v133 = vmax.f32 %v132, 0.0
    %v134 = vld [vmem:[%s3 + $0x1] sm:$0x1]
    %v135 = vld [vmem:[%s3 + $0x2] sm:$0x1]
    %v136 = vadd.f32 %v133, 1e-05
    %v137 = vrsqrt.pop %v136
    %139 = vrot.lane.b32.xlu0 %v134, 32
    %v140 = vpop.permute.xlu0 %139
    %v142 = vmul.f32 %v137, %v140
    %144 = vrot.lane.b32.xlu0 %v142, 96
    %v145 = vpop.permute.xlu0 %144
    %v147 = vmul.f32 %v126, %v145
    %v148 = vsub.f32 %v135, %v147
    %v149 = vlaneseq
    %v150 = vshrl.u32 %v149, 7
    %v151 = vsub.s32 0, %v150
    %v152 = vrot.slane %v142, %v151
    %154 = vrot.lane.b32.xlu0 %v152, 96
    %v155 = vpop.permute.xlu0 %154
    %v157 = vmul.f32 %v111, %v155
    %v158 = vlaneseq
    %v159 = vshrl.u32 %v158, 7
    %v160 = vsub.s32 0, %v159
    %v161 = vrot.slane %v148, %v160
    %v162 = vadd.f32 %v157, %v161
    %v163 = vld [vmem:[%s2 + $0x40] sm:$0xff]
    %v164 = vld [vmem:[%s2 + $0x48] sm:$0xff]
    %v165 = vld [vmem:[%s2 + $0x50] sm:$0xff]
    %v166 = vld [vmem:[%s2 + $0x58] sm:$0xff]
    %v167 = vld [vmem:[%s3 + $0x3] sm:$0x1]
    %v168 = vlaneseq
    %v169 = vshrl.u32 %v168, 7
    %v170 = vsub.s32 0, %v169
    %v171 = vrot.slane %v167, %v170
    %v173 = vsel %vm117, %v162, 0
    %175 = vmatprep.subr.mxu0 0.0
    %176 = vmatpush1.msra.mxu0 0.0
    %177 = vmatprep.subr.mxu0 0.0
    %178 = vmatpush1.msra.mxu0 0.0
    %179 = vmatprep.subr.mxu0 0.0
    %180 = vmatpush1.msra.mxu0 0.0
    %181 = vmatprep.subr.mxu0 0.0
    %182 = vmatpush1.msra.mxu0 0.0
    %183 = vmatprep.subr.mxu0 0.0
    %184 = vmatpush1.msra.mxu0 0.0
    %185 = vmatprep.subr.mxu0 0.0
    %186 = vmatpush1.msra.mxu0 0.0
    %187 = vmatprep.subr.mxu0 0.0
    %188 = vmatpush1.msra.mxu0 0.0
    %189 = vmatprep.subr.mxu0 0.0
    %190 = vmatpush1.msra.mxu0 0.0
    %191 = vmatprep.subr.mxu0 0.0
    %192 = vmatpush1.msra.mxu0 0.0
    %193 = vmatprep.subr.mxu0 0.0
    %194 = vmatpush1.msra.mxu0 0.0
    %195 = vmatprep.subr.mxu0 0.0
    %196 = vmatpush1.msra.mxu0 0.0
    %197 = vmatprep.subr.mxu0 0.0
    %198 = vmatpush1.msra.mxu0 0.0
    %199 = vmatprep.subr.mxu0 0.0
    %200 = vmatpush1.msra.mxu0 %v166
    %201 = vmatprep.subr.mxu0 0.0
    %202 = vmatpush1.msra.mxu0 %v165
    %203 = vmatprep.subr.mxu0 0.0
    %204 = vmatpush1.msra.mxu0 %v164
    %205 = vmatprep.subr.mxu0 0.0
    %206 = vmatpush1.msra.mxu0 %v163
    %207 = vmatprep.subr.mxu0 0.0
    %208 = vmatpush2.msra.mxu0 0.0
    %209 = vmatprep.subr.mxu0 0.0
    %210 = vmatpush2.msra.mxu0 0.0
    %211 = vmatprep.subr.mxu0 0.0
    %212 = vmatpush2.msra.mxu0 0.0
    %213 = vmatprep.subr.mxu0 0.0
    %214 = vmatpush2.msra.mxu0 0.0
    %215 = vmatprep.subr.mxu0 0.0
    %216 = vmatpush2.msra.mxu0 0.0
    %217 = vmatprep.subr.mxu0 0.0
    %218 = vmatpush2.msra.mxu0 0.0
    %219 = vmatprep.subr.mxu0 0.0
    %220 = vmatpush2.msra.mxu0 0.0
    %221 = vmatprep.subr.mxu0 0.0
    %222 = vmatpush2.msra.mxu0 0.0
    %223 = vmatprep.subr.mxu0 0.0
    %224 = vmatpush2.msra.mxu0 0.0
    %225 = vmatprep.subr.mxu0 0.0
    %226 = vmatpush2.msra.mxu0 0.0
    %227 = vmatprep.subr.mxu0 0.0
    %228 = vmatpush2.msra.mxu0 0.0
    %229 = vmatprep.subr.mxu0 0.0
    %230 = vmatpush2.msra.mxu0 0.0
    %231 = vmatprep.subr.mxu0 0.0
    %232 = vmatpush2.msra.mxu0 0.0
    %233 = vmatprep.subr.mxu0 0.0
    %234 = vmatpush2.msra.mxu0 0.0
    %235 = vmatprep.subr.mxu0 0.0
    %236 = vmatpush2.msra.mxu0 0.0
    %237 = vmatprep.subr.mxu0 0.0
    %238 = vmatpush2.msra.mxu0 0.0
    %239 = vmatprep.mubr.f32.mxu0 0.0
    %240 = vmatmul.mubr.f32.gmra.mxu0 %v173
    %v241 = vpop.f32.mrf.mxu0
    %v242 = vadd.f32 %v171, %v241
    %v243 = vpop.f32.mrf.mxu0
    %244 = vdwg.mxu0
    %v245 = vmax.f32 %v242, 0.0
    %v246 = vmul.f32 %v245, %v245
    %248 = vrot.lane.b32.xlu0 %v246, 16
    %v249 = vpop.permute.xlu0 %248
    %vm251 = vcmask 130048
    %v252 = vsel %vm251, %v245, %v249
    %v253 = vsel %vm117, %v252, 0.0
    %v254 = vrot.slane %v253, 4
    %v255 = vadd.f32 %v253, %v254
    %v256 = vrot.slane %v255, 2
    %v257 = vadd.f32 %v255, %v256
    %v258 = vrot.slane %v257, 1
    %v259 = vadd.f32 %v257, %v258
    %v260 = vmul.f32 %v259, 0.125
    %v261 = vmul.f32 %v260, %v260
    %263 = vrot.lane.b32.xlu0 %v261, 16
    %v264 = vpop.permute.xlu0 %263
    %v266 = vsub.f32 %v260, %v264
    %v267 = vmax.f32 %v266, 0.0
    %v268 = vld [vmem:[%s3 + $0x4] sm:$0x1]
    %v269 = vld [vmem:[%s3 + $0x5] sm:$0x1]
    %v270 = vadd.f32 %v267, 1e-05
    %v271 = vrsqrt.pop %v270
    %273 = vrot.lane.b32.xlu0 %v268, 16
    %v274 = vpop.permute.xlu0 %273
    %v276 = vmul.f32 %v271, %v274
    %278 = vrot.lane.b32.xlu0 %v276, 112
    %v279 = vpop.permute.xlu0 %278
    %v281 = vmul.f32 %v260, %v279
    %v282 = vsub.f32 %v269, %v281
    %v283 = vlaneseq
    %v284 = vshrl.u32 %v283, 7
    %v285 = vsub.s32 0, %v284
    %v286 = vrot.slane %v276, %v285
    %288 = vrot.lane.b32.xlu0 %v286, 112
    %v289 = vpop.permute.xlu0 %288
    %v291 = vmul.f32 %v245, %v289
    %v292 = vlaneseq
    %v293 = vshrl.u32 %v292, 7
    %v294 = vsub.s32 0, %v293
    %v295 = vrot.slane %v282, %v294
    %v296 = vadd.f32 %v291, %v295
    %v297 = vld [vmem:[%s2 + $0x60] sm:$0xff]
    %v298 = vld [vmem:[%s2 + $0x68] sm:$0xff]
    %v299 = vld [vmem:[%s3 + $0x6] sm:$0x1]
    %v300 = vlaneseq
    %v301 = vshrl.u32 %v300, 7
    %v302 = vsub.s32 0, %v301
    %v303 = vrot.slane %v299, %v302
    %v305 = vsel %vm251, %v296, 0
    %307 = vmatprep.subr.mxu0 0.0
    %308 = vmatpush1.msra.mxu0 0.0
    %309 = vmatprep.subr.mxu0 0.0
    %310 = vmatpush1.msra.mxu0 0.0
    %311 = vmatprep.subr.mxu0 0.0
    %312 = vmatpush1.msra.mxu0 0.0
    %313 = vmatprep.subr.mxu0 0.0
    %314 = vmatpush1.msra.mxu0 0.0
    %315 = vmatprep.subr.mxu0 0.0
    %316 = vmatpush1.msra.mxu0 0.0
    %317 = vmatprep.subr.mxu0 0.0
    %318 = vmatpush1.msra.mxu0 0.0
    %319 = vmatprep.subr.mxu0 0.0
    %320 = vmatpush1.msra.mxu0 0.0
    %321 = vmatprep.subr.mxu0 0.0
    %322 = vmatpush1.msra.mxu0 0.0
    %323 = vmatprep.subr.mxu0 0.0
    %324 = vmatpush1.msra.mxu0 0.0
    %325 = vmatprep.subr.mxu0 0.0
    %326 = vmatpush1.msra.mxu0 0.0
    %327 = vmatprep.subr.mxu0 0.0
    %328 = vmatpush1.msra.mxu0 0.0
    %329 = vmatprep.subr.mxu0 0.0
    %330 = vmatpush1.msra.mxu0 0.0
    %331 = vmatprep.subr.mxu0 0.0
    %332 = vmatpush1.msra.mxu0 0.0
    %333 = vmatprep.subr.mxu0 0.0
    %334 = vmatpush1.msra.mxu0 0.0
    %335 = vmatprep.subr.mxu0 0.0
    %336 = vmatpush1.msra.mxu0 %v298
    %337 = vmatprep.subr.mxu0 0.0
    %338 = vmatpush1.msra.mxu0 %v297
    %339 = vmatprep.subr.mxu0 0.0
    %340 = vmatpush2.msra.mxu0 0.0
    %341 = vmatprep.subr.mxu0 0.0
    %342 = vmatpush2.msra.mxu0 0.0
    %343 = vmatprep.subr.mxu0 0.0
    %344 = vmatpush2.msra.mxu0 0.0
    %345 = vmatprep.subr.mxu0 0.0
    %346 = vmatpush2.msra.mxu0 0.0
    %347 = vmatprep.subr.mxu0 0.0
    %348 = vmatpush2.msra.mxu0 0.0
    %349 = vmatprep.subr.mxu0 0.0
    %350 = vmatpush2.msra.mxu0 0.0
    %351 = vmatprep.subr.mxu0 0.0
    %352 = vmatpush2.msra.mxu0 0.0
    %353 = vmatprep.subr.mxu0 0.0
    %354 = vmatpush2.msra.mxu0 0.0
    %355 = vmatprep.subr.mxu0 0.0
    %356 = vmatpush2.msra.mxu0 0.0
    %357 = vmatprep.subr.mxu0 0.0
    %358 = vmatpush2.msra.mxu0 0.0
    %359 = vmatprep.subr.mxu0 0.0
    %360 = vmatpush2.msra.mxu0 0.0
    %361 = vmatprep.subr.mxu0 0.0
    %362 = vmatpush2.msra.mxu0 0.0
    %363 = vmatprep.subr.mxu0 0.0
    %364 = vmatpush2.msra.mxu0 0.0
    %365 = vmatprep.subr.mxu0 0.0
    %366 = vmatpush2.msra.mxu0 0.0
    %367 = vmatprep.subr.mxu0 0.0
    %368 = vmatpush2.msra.mxu0 0.0
    %369 = vmatprep.subr.mxu0 0.0
    %370 = vmatpush2.msra.mxu0 0.0
    %371 = vmatprep.mubr.f32.mxu0 0.0
    %372 = vmatmul.mubr.f32.gmra.mxu0 %v305
    %v373 = vpop.f32.mrf.mxu0
    %v374 = vadd.f32 %v303, %v373
    %v375 = vpop.f32.mrf.mxu0
    %376 = vdwg.mxu0
    %v377 = vmax.f32 %v374, 0.0
    %v378 = vmul.f32 %v377, %v377
    %380 = vrot.lane.b32.xlu0 %v378, 4
    %v381 = vpop.permute.xlu0 %380
    %vm383 = vcmask 31744
    %v384 = vsel %vm383, %v377, %v381
    %vm385 = vcmask 64512
    %v386 = vsel %vm385, %v384, 0.0
    %v387 = vrot.slane %v386, 4
    %v388 = vadd.f32 %v386, %v387
    %v389 = vrot.slane %v388, 2
    %v390 = vadd.f32 %v388, %v389
    %v391 = vrot.slane %v390, 1
    %v392 = vadd.f32 %v390, %v391
    %v393 = vmul.f32 %v392, 0.125
    %v394 = vmul.f32 %v393, %v393
    %396 = vrot.lane.b32.xlu0 %v394, 4
    %v397 = vpop.permute.xlu0 %396
    %v399 = vsub.f32 %v393, %v397
    %v400 = vmax.f32 %v399, 0.0
    %v401 = vld [vmem:[%s3 + $0x7] sm:$0x1]
    %v402 = vld [vmem:[%s3 + $0x8] sm:$0x1]
    %v403 = vadd.f32 %v400, 1e-05
    %v404 = vrsqrt.pop %v403
    %406 = vrot.lane.b32.xlu0 %v401, 4
    %v407 = vpop.permute.xlu0 %406
    %v409 = vmul.f32 %v404, %v407
    %411 = vrot.lane.b32.xlu0 %v409, 124
    %v412 = vpop.permute.xlu0 %411
    %v414 = vmul.f32 %v393, %v412
    %v415 = vsub.f32 %v402, %v414
    %v416 = vlaneseq
    %v417 = vshrl.u32 %v416, 7
    %v418 = vsub.s32 0, %v417
    %v419 = vrot.slane %v409, %v418
    %421 = vrot.lane.b32.xlu0 %v419, 124
    %v422 = vpop.permute.xlu0 %421
    %v424 = vmul.f32 %v377, %v422
    %v425 = vlaneseq
    %v426 = vshrl.u32 %v425, 7
    %v427 = vsub.s32 0, %v426
    %v428 = vrot.slane %v415, %v427
    %v429 = vadd.f32 %v424, %v428
    %v430 = vmul.f32 %v429, 0.5
    %v431 = vmul.f32 %v430, 1.442695
    %v432 = vpow.pop %v431
    %434 = vrot.lane.b32.xlu0 %v432, 126
    %v435 = vpop.permute.xlu0 %434
    %v437 = vmul.f32 %v23, %v435
    %v438 = vadd.f32 %v437, %v429
    %v439 = vld [vmem:[%s2 + $0x70] sm:$0x1]
    %v440 = vld [vmem:[%s2 + $0x71] sm:$0x1]
    %v441 = vld [vmem:[%s3 + $0x9] sm:$0x1]
    %443 = vset.pattern.permute.xlu0 0
    %444 = vperm.xlu0 %443, %v438
    %v445 = vpop.permute.xlu0 %444
    %v447 = vlaneseq
    %v448 = vshrl.u32 %v447, 7
    %v449 = vsub.s32 0, %v448
    %v450 = vrot.slane %v439, %v449
    %v451 = vmul.f32 %v445, %v450
    %452 = vset.pattern.permute.xlu0 1
    %453 = vperm.xlu0 %452, %v438
    %v454 = vpop.permute.xlu0 %453
    %v456 = vlaneseq
    %v457 = vshrl.u32 %v456, 7
    %v458 = vsub.s32 0, %v457
    %v459 = vrot.slane %v440, %v458
    %v460 = vmul.f32 %v454, %v459
    %v461 = vadd.f32 %v451, %v460
    %v462 = vlaneseq
    %v463 = vshrl.u32 %v462, 7
    %v464 = vsub.s32 0, %v463
    %v465 = vrot.slane %v441, %v464
    %v466 = vadd.f32 %v461, %v465
    %v467 = vmax.f32 %v466, 0.0
    %v468 = vmul.f32 %v467, %v467
    %470 = vrot.lane.b32.xlu0 %v468, 16
    %v471 = vpop.permute.xlu0 %470
    %v473 = vsel %vm251, %v467, %v471
    %v474 = vsel %vm117, %v473, 0.0
    %v475 = vrot.slane %v474, 4
    %v476 = vadd.f32 %v474, %v475
    %v477 = vrot.slane %v476, 2
    %v478 = vadd.f32 %v476, %v477
    %v479 = vrot.slane %v478, 1
    %v480 = vadd.f32 %v478, %v479
    %v481 = vmul.f32 %v480, 0.125
    %v482 = vmul.f32 %v481, %v481
    %484 = vrot.lane.b32.xlu0 %v482, 16
    %v485 = vpop.permute.xlu0 %484
    %v487 = vsub.f32 %v481, %v485
    %v488 = vmax.f32 %v487, 0.0
    %v489 = vld [vmem:[%s3 + $0xa] sm:$0x1]
    %v490 = vld [vmem:[%s3 + $0xb] sm:$0x1]
    %v491 = vadd.f32 %v488, 1e-05
    %v492 = vrsqrt.pop %v491
    %494 = vrot.lane.b32.xlu0 %v489, 16
    %v495 = vpop.permute.xlu0 %494
    %v497 = vmul.f32 %v492, %v495
    %499 = vrot.lane.b32.xlu0 %v497, 112
    %v500 = vpop.permute.xlu0 %499
    %v502 = vmul.f32 %v481, %v500
    %v503 = vsub.f32 %v490, %v502
    %v504 = vlaneseq
    %v505 = vshrl.u32 %v504, 7
    %v506 = vsub.s32 0, %v505
    %v507 = vrot.slane %v497, %v506
    %509 = vrot.lane.b32.xlu0 %v507, 112
    %v510 = vpop.permute.xlu0 %509
    %v512 = vmul.f32 %v467, %v510
    %v513 = vlaneseq
    %v514 = vshrl.u32 %v513, 7
    %v515 = vsub.s32 0, %v514
    %v516 = vrot.slane %v503, %v515
    %v517 = vadd.f32 %v512, %v516
    %v518 = vld [vmem:[%s2 + $0x78] sm:$0xff]
    %v519 = vld [vmem:[%s2 + $0x80] sm:$0xff]
    %v520 = vld [vmem:[%s3 + $0xc] sm:$0x1]
    %v521 = vlaneseq
    %v522 = vshrl.u32 %v521, 7
    %v523 = vsub.s32 0, %v522
    %v524 = vrot.slane %v520, %v523
    %v526 = vsel %vm251, %v517, 0
    %528 = vmatprep.subr.mxu0 0.0
    %529 = vmatpush1.msra.mxu0 0.0
    %530 = vmatprep.subr.mxu0 0.0
    %531 = vmatpush1.msra.mxu0 0.0
    %532 = vmatprep.subr.mxu0 0.0
    %533 = vmatpush1.msra.mxu0 0.0
    %534 = vmatprep.subr.mxu0 0.0
    %535 = vmatpush1.msra.mxu0 0.0
    %536 = vmatprep.subr.mxu0 0.0
    %537 = vmatpush1.msra.mxu0 0.0
    %538 = vmatprep.subr.mxu0 0.0
    %539 = vmatpush1.msra.mxu0 0.0
    %540 = vmatprep.subr.mxu0 0.0
    %541 = vmatpush1.msra.mxu0 0.0
    %542 = vmatprep.subr.mxu0 0.0
    %543 = vmatpush1.msra.mxu0 0.0
    %544 = vmatprep.subr.mxu0 0.0
    %545 = vmatpush1.msra.mxu0 0.0
    %546 = vmatprep.subr.mxu0 0.0
    %547 = vmatpush1.msra.mxu0 0.0
    %548 = vmatprep.subr.mxu0 0.0
    %549 = vmatpush1.msra.mxu0 0.0
    %550 = vmatprep.subr.mxu0 0.0
    %551 = vmatpush1.msra.mxu0 0.0
    %552 = vmatprep.subr.mxu0 0.0
    %553 = vmatpush1.msra.mxu0 0.0
    %554 = vmatprep.subr.mxu0 0.0
    %555 = vmatpush1.msra.mxu0 0.0
    %556 = vmatprep.subr.mxu0 0.0
    %557 = vmatpush1.msra.mxu0 %v519
    %558 = vmatprep.subr.mxu0 0.0
    %559 = vmatpush1.msra.mxu0 %v518
    %560 = vmatprep.subr.mxu0 0.0
    %561 = vmatpush2.msra.mxu0 0.0
    %562 = vmatprep.subr.mxu0 0.0
    %563 = vmatpush2.msra.mxu0 0.0
    %564 = vmatprep.subr.mxu0 0.0
    %565 = vmatpush2.msra.mxu0 0.0
    %566 = vmatprep.subr.mxu0 0.0
    %567 = vmatpush2.msra.mxu0 0.0
    %568 = vmatprep.subr.mxu0 0.0
    %569 = vmatpush2.msra.mxu0 0.0
    %570 = vmatprep.subr.mxu0 0.0
    %571 = vmatpush2.msra.mxu0 0.0
    %572 = vmatprep.subr.mxu0 0.0
    %573 = vmatpush2.msra.mxu0 0.0
    %574 = vmatprep.subr.mxu0 0.0
    %575 = vmatpush2.msra.mxu0 0.0
    %576 = vmatprep.subr.mxu0 0.0
    %577 = vmatpush2.msra.mxu0 0.0
    %578 = vmatprep.subr.mxu0 0.0
    %579 = vmatpush2.msra.mxu0 0.0
    %580 = vmatprep.subr.mxu0 0.0
    %581 = vmatpush2.msra.mxu0 0.0
    %582 = vmatprep.subr.mxu0 0.0
    %583 = vmatpush2.msra.mxu0 0.0
    %584 = vmatprep.subr.mxu0 0.0
    %585 = vmatpush2.msra.mxu0 0.0
    %586 = vmatprep.subr.mxu0 0.0
    %587 = vmatpush2.msra.mxu0 0.0
    %588 = vmatprep.subr.mxu0 0.0
    %589 = vmatpush2.msra.mxu0 0.0
    %590 = vmatprep.subr.mxu0 0.0
    %591 = vmatpush2.msra.mxu0 0.0
    %592 = vmatprep.mubr.f32.mxu0 0.0
    %593 = vmatmul.mubr.f32.gmra.mxu0 %v526
    %v594 = vpop.f32.mrf.mxu0
    %v595 = vadd.f32 %v524, %v594
    %v596 = vpop.f32.mrf.mxu0
    %597 = vdwg.mxu0
    %v598 = vmax.f32 %v595, 0.0
    %v599 = vmul.f32 %v598, %v598
    %601 = vrot.lane.b32.xlu0 %v599, 32
    %v602 = vpop.permute.xlu0 %601
    %v604 = vsel %vm117, %v598, %v602
    %v605 = vsel %vm37, %v604, 0.0
    %v606 = vrot.slane %v605, 4
    %v607 = vadd.f32 %v605, %v606
    %v608 = vrot.slane %v607, 2
    %v609 = vadd.f32 %v607, %v608
    %v610 = vrot.slane %v609, 1
    %v611 = vadd.f32 %v609, %v610
    %v612 = vmul.f32 %v611, 0.125
    %v613 = vmul.f32 %v612, %v612
    %615 = vrot.lane.b32.xlu0 %v613, 32
    %v616 = vpop.permute.xlu0 %615
    %v618 = vsub.f32 %v612, %v616
    %v619 = vmax.f32 %v618, 0.0
    %v620 = vld [vmem:[%s3 + $0xd] sm:$0x1]
    %v621 = vld [vmem:[%s3 + $0xe] sm:$0x1]
    %v622 = vadd.f32 %v619, 1e-05
    %v623 = vrsqrt.pop %v622
    %625 = vrot.lane.b32.xlu0 %v620, 32
    %v626 = vpop.permute.xlu0 %625
    %v628 = vmul.f32 %v623, %v626
    %630 = vrot.lane.b32.xlu0 %v628, 96
    %v631 = vpop.permute.xlu0 %630
    %v633 = vmul.f32 %v612, %v631
    %v634 = vsub.f32 %v621, %v633
    %v635 = vlaneseq
    %v636 = vshrl.u32 %v635, 7
    %v637 = vsub.s32 0, %v636
    %v638 = vrot.slane %v628, %v637
    %640 = vrot.lane.b32.xlu0 %v638, 96
    %v641 = vpop.permute.xlu0 %640
    %v643 = vmul.f32 %v598, %v641
    %v644 = vlaneseq
    %v645 = vshrl.u32 %v644, 7
    %v646 = vsub.s32 0, %v645
    %v647 = vrot.slane %v634, %v646
    %v648 = vadd.f32 %v643, %v647
    %v649 = vld [vmem:[%s2 + $0x88] sm:$0xff]
    %v650 = vld [vmem:[%s2 + $0x90] sm:$0xff]
    %v651 = vld [vmem:[%s2 + $0x98] sm:$0xff]
    %v652 = vld [vmem:[%s2 + $0xa0] sm:$0xff]
    %v653 = vld [vmem:[%s3 + $0xf] sm:$0x1]
    %v654 = vlaneseq
    %v655 = vshrl.u32 %v654, 7
    %v656 = vsub.s32 0, %v655
    %v657 = vrot.slane %v653, %v656
    %v659 = vsel %vm117, %v648, 0
    %661 = vmatprep.subr.mxu0 0.0
    %662 = vmatpush1.msra.mxu0 0.0
    %663 = vmatprep.subr.mxu0 0.0
    %664 = vmatpush1.msra.mxu0 0.0
    %665 = vmatprep.subr.mxu0 0.0
    %666 = vmatpush1.msra.mxu0 0.0
    %667 = vmatprep.subr.mxu0 0.0
    %668 = vmatpush1.msra.mxu0 0.0
    %669 = vmatprep.subr.mxu0 0.0
    %670 = vmatpush1.msra.mxu0 0.0
    %671 = vmatprep.subr.mxu0 0.0
    %672 = vmatpush1.msra.mxu0 0.0
    %673 = vmatprep.subr.mxu0 0.0
    %674 = vmatpush1.msra.mxu0 0.0
    %675 = vmatprep.subr.mxu0 0.0
    %676 = vmatpush1.msra.mxu0 0.0
    %677 = vmatprep.subr.mxu0 0.0
    %678 = vmatpush1.msra.mxu0 0.0
    %679 = vmatprep.subr.mxu0 0.0
    %680 = vmatpush1.msra.mxu0 0.0
    %681 = vmatprep.subr.mxu0 0.0
    %682 = vmatpush1.msra.mxu0 0.0
    %683 = vmatprep.subr.mxu0 0.0
    %684 = vmatpush1.msra.mxu0 0.0
    %685 = vmatprep.subr.mxu0 0.0
    %686 = vmatpush1.msra.mxu0 %v652
    %687 = vmatprep.subr.mxu0 0.0
    %688 = vmatpush1.msra.mxu0 %v651
    %689 = vmatprep.subr.mxu0 0.0
    %690 = vmatpush1.msra.mxu0 %v650
    %691 = vmatprep.subr.mxu0 0.0
    %692 = vmatpush1.msra.mxu0 %v649
    %693 = vmatprep.subr.mxu0 0.0
    %694 = vmatpush2.msra.mxu0 0.0
    %695 = vmatprep.subr.mxu0 0.0
    %696 = vmatpush2.msra.mxu0 0.0
    %697 = vmatprep.subr.mxu0 0.0
    %698 = vmatpush2.msra.mxu0 0.0
    %699 = vmatprep.subr.mxu0 0.0
    %700 = vmatpush2.msra.mxu0 0.0
    %701 = vmatprep.subr.mxu0 0.0
    %702 = vmatpush2.msra.mxu0 0.0
    %703 = vmatprep.subr.mxu0 0.0
    %704 = vmatpush2.msra.mxu0 0.0
    %705 = vmatprep.subr.mxu0 0.0
    %706 = vmatpush2.msra.mxu0 0.0
    %707 = vmatprep.subr.mxu0 0.0
    %708 = vmatpush2.msra.mxu0 0.0
    %709 = vmatprep.subr.mxu0 0.0
    %710 = vmatpush2.msra.mxu0 0.0
    %711 = vmatprep.subr.mxu0 0.0
    %712 = vmatpush2.msra.mxu0 0.0
    %713 = vmatprep.subr.mxu0 0.0
    %714 = vmatpush2.msra.mxu0 0.0
    %715 = vmatprep.subr.mxu0 0.0
    %716 = vmatpush2.msra.mxu0 0.0
    %717 = vmatprep.subr.mxu0 0.0
    %718 = vmatpush2.msra.mxu0 0.0
    %719 = vmatprep.subr.mxu0 0.0
    %720 = vmatpush2.msra.mxu0 0.0
    %721 = vmatprep.subr.mxu0 0.0
    %722 = vmatpush2.msra.mxu0 0.0
    %723 = vmatprep.subr.mxu0 0.0
    %724 = vmatpush2.msra.mxu0 0.0
    %725 = vmatprep.mubr.f32.mxu0 0.0
    %726 = vmatmul.mubr.f32.gmra.mxu0 %v659
    %v727 = vpop.f32.mrf.mxu0
    %v728 = vadd.f32 %v657, %v727
    %v729 = vpop.f32.mrf.mxu0
    %730 = vdwg.mxu0
    %v731 = vxor.u32 %v728, 2147483648
    %v732 = vmul.f32 %v731, 1.442695
    %v733 = vpow.pop %v732
    %v734 = vadd.f32 %v733, 1.0
    %v735 = vrcp.pop %v734
    %v736 = vmul.f32 1.0, %v735
    %737 = vst.msk [vmem:[#allocation2] sm:$0xff] %vm37, %v736
    %vm738 = vcmask 15360
    %739 = vst.msk [vmem:[%s5] sm:$0xff] %vm738, %v438
    %740 = vst.msk [vmem:[%s6] sm:$0xff] %vm738, %v429
    %742 = vrot.lane.b32.xlu0 %v429, 126
    %v743 = vpop.permute.xlu0 %742
    %745 = vst.msk [vmem:[%s7] sm:$0xff] %vm738, %v743
    // Predicated region
    $region18: #{vae_forward.1} parent=1 // pred_check
      _
    $region19: #{vae_forward.1} parent=1 // pred_check_branch
      %747 = sbr.rel (0) target = $region21
    $region20: #{vae_forward.1} parent=1 // pred_region
      %s749 = ssub.s32 128, 128
      %750 = vsyncadd [#allocation3], %s749
      %s752 = sshll.u32 [#allocation2], 4
      %s753 = int_to_ptr.vmem [resolvable:$true] %s752
      %755 = dma.vmem_to_hbm [thread:$0]  %s753, 128, %s4, [#allocation3]
    $region21: #{vae_forward.1} parent=1 // pred_fallthru
      _
    // Predicated region
    $region22: #{vae_forward.1} parent=1 // pred_check
      _
    $region23: #{vae_forward.1} parent=1 // pred_check_branch
      %757 = sbr.rel (0) target = $region25
    $region24: #{vae_forward.1} parent=1 // pred_region
      _
    $region25: #{vae_forward.1} parent=1 // pred_fallthru
      _
    // Predicated region
    $region26: #{vae_forward.1} parent=1 // pred_check
      _
    $region27: #{vae_forward.1} parent=1 // pred_check_branch
      %759 = sbr.rel (0) target = $region29
    $region28: #{vae_forward.1} parent=1 // pred_region
      _
    $region29: #{vae_forward.1} parent=1 // pred_fallthru
      _
    // Predicated region
    $region30: #{vae_forward.1} parent=1 // pred_check
      _
    $region31: #{vae_forward.1} parent=1 // pred_check_branch
      %761 = sbr.rel (0) target = $region33
    $region32: #{vae_forward.1} parent=1 // pred_region
      _
    $region33: #{vae_forward.1} parent=1 // pred_fallthru
      _
    // Predicated region
    $region34: #{vae_forward.1} parent=1 // pred_check
      _
    $region35: #{vae_forward.1} parent=1 // pred_check_branch
      %763 = sbr.rel (0) target = $region37
    $region36: #{vae_forward.1} parent=1 // pred_region
      %764 = dma.done [#allocation3], 128
    $region37: #{vae_forward.1} parent=1 // pred_fallthru
      _
    // Predicated region
    $region38: #{vae_forward.1} parent=1 // pred_check
      _
    $region39: #{vae_forward.1} parent=1 // pred_check_branch
      %766 = sbr.rel (0) target = $region41
    $region40: #{vae_forward.1} parent=1 // pred_region
      _
    $region41: #{vae_forward.1} parent=1 // pred_fallthru
      _
    // Predicated region
    $region42: #{vae_forward.1} parent=1 // pred_check
      _
    $region43: #{vae_forward.1} parent=1 // pred_check_branch
      %768 = sbr.rel (0) target = $region45
    $region44: #{vae_forward.1} parent=1 // pred_region
      _
    $region45: #{vae_forward.1} parent=1 // pred_fallthru
      _
    // Predicated region
    $region46: #{vae_forward.1} parent=1 // pred_check
      _
    $region47: #{vae_forward.1} parent=1 // pred_check_branch
      %770 = sbr.rel (0) target = $region49
    $region48: #{vae_forward.1} parent=1 // pred_region
      _
    $region49: #{vae_forward.1} parent=1 // pred_fallthru
      _
    %771 = vsyncpa [#allocation3], 1

</llo_original>
